<compile_context>
chip_gen: v5e
topology: v5e:2x2
jax: 0.10.0
libtpu: 0.0.40
codegen_flags: <defaults>
</compile_context>

<pallas_src>
import functools

import jax
import jax.numpy as jnp
from jax import lax
from jax.experimental import pallas as pl
from jax.experimental.pallas import tpu as pltpu


def actor_critic_kernel(x_ref, w1_ref, b1_ref, w2_ref, b2_ref, out_ref, *, output_dim):
    # x arrives already in bf16 (cast once in the wrapper, halves x DMA traffic).
    x = x_ref[...]

    # Fused layer 1: [TB, in] @ [in, 2*hidden] -> h = [h_critic | h_actor], f32 accum.
    h = jnp.dot(x, w1_ref[...], preferred_element_type=jnp.float32) + b1_ref[...]
    h = jnp.maximum(h, 0.0)

    # Fused layer 2 (block-diagonal, lane-padded to 128 cols):
    #   col 0 = value, cols 1..output_dim = actor logits, remaining cols = 0.
    head = jnp.dot(h.astype(jnp.bfloat16), w2_ref[...],
                   preferred_element_type=jnp.float32) + b2_ref[...]

    # Numerically-stable softmax restricted to the logit columns; col 0 (value) and the
    # zero-padding columns are passed through untouched.  All lane-wide ops.
    col = lax.broadcasted_iota(jnp.int32, head.shape, 1)
    is_logit = jnp.logical_and(col >= 1, col < 1 + output_dim)
    masked = jnp.where(is_logit, head, -jnp.inf)
    m = jnp.max(masked, axis=1, keepdims=True)
    e = jnp.exp(masked - m)                      # non-logit cols -> exp(-inf) = 0
    denom = jnp.sum(e, axis=1, keepdims=True)
    probs = e / denom                            # exact divide: probs sum to 1 in f32

    out_ref[...] = jnp.where(is_logit, probs, head).astype(out_ref.dtype)


def _pick_tile_b(B):
    """Batch tile: multiple of 16 (bf16 sublane tiling), <= 1024 rows, and >= 2 grid
    steps when the batch allows it (pipelining + v7x dual-TC sharding)."""
    cap = 1024
    if B <= cap:
        for t in (512, 256, 128, 64, 32, 16):
            if t < B and B % t == 0:
                return t
        return B                                  # single tile == full batch is legal
    for t in range(cap, 15, -16):
        if B % t == 0:
            return t
    return B


def actor_critic_forward(x, fused, *, tile_b=None):
    """Returns (probs, value) matching ActorCritic.forward semantics
    (probs parameterizes the Categorical distribution)."""
    B, input_dim = x.shape
    out_pad = fused["w2"].shape[1]               # 128-lane padded head width
    output_dim = fused["output_dim"]
    two_hidden = fused["w1"].shape[1]

    if tile_b is None:
        tile_b = _pick_tile_b(B)
    assert B % tile_b == 0, "batch must be divisible by tile_b"
    assert tile_b == B or tile_b % 16 == 0, "bf16 x tiling needs tile_b % 16 == 0"

    x_bf16 = x.astype(jnp.bfloat16)              # cast once; halves x HBM traffic
    grid = (B // tile_b,)

    # Weights/biases: full-array blocks with constant index maps -> VMEM-resident.
    const = lambda shape: pl.BlockSpec(shape, lambda i: tuple(0 for _ in shape))

    cost = pl.CostEstimate(
        flops=2 * B * input_dim * two_hidden + 2 * B * two_hidden * out_pad
              + 8 * B * out_pad,
        transcendentals=B * out_pad,
        bytes_accessed=(x_bf16.size * 2 + fused["w1"].size * 2 + fused["b1"].size * 4
                        + fused["w2"].size * 2 + fused["b2"].size * 4
                        + B * out_pad * 4),
    )

    out = pl.pallas_call(
        functools.partial(actor_critic_kernel, output_dim=output_dim),
        out_shape=jax.ShapeDtypeStruct((B, out_pad), jnp.float32),
        grid=grid,
        in_specs=[
            pl.BlockSpec((tile_b, input_dim), lambda i: (i, 0)),   # x, batch-tiled, bf16
            const(fused["w1"].shape), const(fused["b1"].shape),
            const(fused["w2"].shape), const(fused["b2"].shape),
        ],
        out_specs=pl.BlockSpec((tile_b, out_pad), lambda i: (i, 0)),
        compiler_params=pltpu.CompilerParams(
            dimension_semantics=("parallel",)),   # shards batch tiles across TCs on v7x
        cost_estimate=cost,
    )(x_bf16, fused["w1"], fused["b1"], fused["w2"], fused["b2"])

    value = out[:, 0:1]
    probs = out[:, 1:1 + output_dim]
    return probs, value


def init_params(key, input_dim, output_dim, hidden_dim):
    """Deterministic synthetic parameters. Weights stored [in_features, out_features]."""
    ks = jax.random.split(key, 8)

    def lin(kw, kb, fan_in, fan_out):
        bound = 1.0 / jnp.sqrt(jnp.float32(fan_in))
        w = jax.random.uniform(kw, (fan_in, fan_out), jnp.float32, -bound, bound)
        b = jax.random.uniform(kb, (1, fan_out), jnp.float32, -bound, bound)
        return w, b

    w1c, b1c = lin(ks[0], ks[1], input_dim, hidden_dim)
    w2c, b2c = lin(ks[2], ks[3], hidden_dim, 1)
    w1a, b1a = lin(ks[4], ks[5], input_dim, hidden_dim)
    w2a, b2a = lin(ks[6], ks[7], hidden_dim, output_dim)
    return dict(w1c=w1c, b1c=b1c, w2c=w2c, b2c=b2c,
                w1a=w1a, b1a=b1a, w2a=w2a, b2a=b2a)


def fuse_params(p, compute_dtype=jnp.bfloat16):
    """Build fused kernel params (host-side, once). Head padded to 128 lanes so the
    kernel's output store is lane-dense (unmasked vst)."""
    hidden = p["w1c"].shape[1]
    output_dim = p["w2a"].shape[1]
    out_pad = max(128, -(-(1 + output_dim) // 128) * 128)

    # Layer 1: concatenate critic|actor along the output axis.
    w1 = jnp.concatenate([p["w1c"], p["w1a"]], axis=1).astype(compute_dtype)
    b1 = jnp.concatenate([p["b1c"], p["b1a"]], axis=1)            # stays f32

    # Layer 2: block-diagonal, zero-padded to a lane-dense width.
    w2 = jnp.zeros((2 * hidden, out_pad), jnp.float32)
    w2 = w2.at[:hidden, 0:1].set(p["w2c"])
    w2 = w2.at[hidden:, 1:1 + output_dim].set(p["w2a"])
    w2 = w2.astype(compute_dtype)
    b2 = jnp.zeros((1, out_pad), jnp.float32)
    b2 = b2.at[:, 0:1].set(p["b2c"])
    b2 = b2.at[:, 1:1 + output_dim].set(p["b2a"])                 # stays f32

    return dict(w1=w1, b1=b1, w2=w2, b2=b2, output_dim=output_dim)


def reference_forward(x, p):
    h_c = jnp.maximum(x @ p["w1c"] + p["b1c"], 0.0)
    value = h_c @ p["w2c"] + p["b2c"]
    h_a = jnp.maximum(x @ p["w1a"] + p["b1a"], 0.0)
    logits = h_a @ p["w2a"] + p["b2a"]
    probs = jax.nn.softmax(logits, axis=1)
    return probs, value


if __name__ == "__main__":
    # Small demo shapes (flat state-vector inputs). Production use should batch many
    # env steps (B >= 256) into one call.  batch=32 with auto tile_b=16 gives a
    # 2-step parallel grid (exercises pipelining / dual-TC sharding).
    batch = 32
    input_dim = 32
    hidden_dim = 32
    output_dim = 8

    key = jax.random.PRNGKey(0)
    k_x, k_p = jax.random.split(key)
    x = jax.random.normal(k_x, (batch, input_dim), dtype=jnp.float32)
    raw = init_params(k_p, input_dim, output_dim, hidden_dim)
    fused = fuse_params(raw)

    probs, value = actor_critic_forward(x, fused)
    probs = jax.block_until_ready(probs)
    value = jax.block_until_ready(value)

    # Sanity check against a pure-JAX f32 reference (bf16 matmuls loosen agreement to
    # ~1e-2); softmax normalization is exact in f32.
    probs_ref, value_ref = reference_forward(x, raw)
    assert probs.shape == (batch, output_dim)
    assert value.shape == (batch, 1)
    assert jnp.allclose(probs, probs_ref, atol=5e-2, rtol=5e-2)
    assert jnp.allclose(value, value_ref, atol=5e-2, rtol=5e-2)
    assert jnp.allclose(jnp.sum(probs, axis=1), 1.0, atol=1e-3)

    print("KERNEL_OK")
</pallas_src>

<mosaic_0001>
module attributes {stable_mosaic.version = 11 : i64} {
  func.func @actor_critic_kernel(%arg0: i32, %arg1: memref<16x32xbf16, #tpu.memory_space<vmem>>, %arg2: memref<32x64xbf16, #tpu.memory_space<vmem>>, %arg3: memref<1x64xf32, #tpu.memory_space<vmem>>, %arg4: memref<64x128xbf16, #tpu.memory_space<vmem>>, %arg5: memref<1x128xf32, #tpu.memory_space<vmem>>, %arg6: memref<16x128xf32, #tpu.memory_space<vmem>>) attributes {dimension_semantics = [#tpu.dimension_semantics<parallel>], iteration_bounds = array<i64: 2>, scalar_prefetch = 0 : i64, scratch_operands = 0 : i64, tpu.core_type = #tpu.core_type<tc>, window_params = [{transform_indices = @transform_0, window_bounds = array<i64: 16, 32>}, {pipeline_mode = #tpu.pipeline_mode<synchronous>, transform_indices = @transform_1, window_bounds = array<i64: 32, 64>}, {pipeline_mode = #tpu.pipeline_mode<synchronous>, transform_indices = @transform_2, window_bounds = array<i64: 1, 64>}, {pipeline_mode = #tpu.pipeline_mode<synchronous>, transform_indices = @transform_3, window_bounds = array<i64: 64, 128>}, {pipeline_mode = #tpu.pipeline_mode<synchronous>, transform_indices = @transform_4, window_bounds = array<i64: 1, 128>}, {transform_indices = @transform_5, window_bounds = array<i64: 16, 128>}]} {
    %c0 = arith.constant 0 : index
    %c0_0 = arith.constant 0 : index
    %0 = vector.load %arg1[%c0, %c0_0] : memref<16x32xbf16, #tpu.memory_space<vmem>>, vector<16x32xbf16>
    %c0_1 = arith.constant 0 : index
    %c0_2 = arith.constant 0 : index
    %1 = vector.load %arg2[%c0_1, %c0_2] : memref<32x64xbf16, #tpu.memory_space<vmem>>, vector<32x64xbf16>
    %cst = arith.constant dense<0.000000e+00> : vector<16x64xf32>
    %2 = tpu.matmul %0, %1, %cst {dimension_numbers = #tpu.dot_dimension_numbers<[1], [0], [0], [1], [0, 0, 1, 1], [], []>} : vector<16x32xbf16>, vector<32x64xbf16>, vector<16x64xf32> -> vector<16x64xf32>
    %c0_3 = arith.constant 0 : index
    %c0_4 = arith.constant 0 : index
    %3 = vector.load %arg3[%c0_3, %c0_4] : memref<1x64xf32, #tpu.memory_space<vmem>>, vector<1x64xf32>
    %4 = vector.broadcast %3 : vector<1x64xf32> to vector<16x64xf32>
    %5 = arith.addf %2, %4 : vector<16x64xf32>
    %cst_5 = arith.constant 0.000000e+00 : f32
    %6 = vector.broadcast %cst_5 : f32 to vector<16x64xf32>
    %7 = arith.maximumf %5, %6 : vector<16x64xf32>
    %8 = arith.truncf %7 : vector<16x64xf32> to vector<16x64xbf16>
    %c0_6 = arith.constant 0 : index
    %c0_7 = arith.constant 0 : index
    %9 = vector.load %arg4[%c0_6, %c0_7] : memref<64x128xbf16, #tpu.memory_space<vmem>>, vector<64x128xbf16>
    %cst_8 = arith.constant dense<0.000000e+00> : vector<16x128xf32>
    %10 = tpu.matmul %8, %9, %cst_8 {dimension_numbers = #tpu.dot_dimension_numbers<[1], [0], [0], [1], [0, 0, 1, 1], [], []>} : vector<16x64xbf16>, vector<64x128xbf16>, vector<16x128xf32> -> vector<16x128xf32>
    %c0_9 = arith.constant 0 : index
    %c0_10 = arith.constant 0 : index
    %11 = vector.load %arg5[%c0_9, %c0_10] : memref<1x128xf32, #tpu.memory_space<vmem>>, vector<1x128xf32>
    %12 = vector.broadcast %11 : vector<1x128xf32> to vector<16x128xf32>
    %13 = arith.addf %10, %12 : vector<16x128xf32>
    %14 = tpu.iota {dimensions = array<i32: 1>} : vector<16x128xi32>
    %c1_i32 = arith.constant 1 : i32
    %15 = vector.broadcast %c1_i32 : i32 to vector<16x128xi32>
    %16 = arith.cmpi sge, %14, %15 : vector<16x128xi32>
    %c9_i32 = arith.constant 9 : i32
    %17 = vector.broadcast %c9_i32 : i32 to vector<16x128xi32>
    %18 = arith.cmpi slt, %14, %17 : vector<16x128xi32>
    %19 = arith.andi %16, %18 : vector<16x128xi1>
    %cst_11 = arith.constant 0xFF800000 : f32
    %20 = vector.broadcast %cst_11 : f32 to vector<16x128xf32>
    %21 = arith.select %19, %13, %20 : vector<16x128xi1>, vector<16x128xf32>
    %cst_12 = arith.constant dense<0xFF800000> : vector<16xf32>
    %22 = vector.multi_reduction <maximumf>, %21, %cst_12 [1] : vector<16x128xf32> to vector<16xf32>
    %23 = vector.shape_cast %22 : vector<16xf32> to vector<16x1xf32>
    %24 = vector.broadcast %23 : vector<16x1xf32> to vector<16x128xf32>
    %25 = arith.subf %21, %24 : vector<16x128xf32>
    %26 = math.exp %25 : vector<16x128xf32>
    %cst_13 = arith.constant dense<0.000000e+00> : vector<16xf32>
    %27 = vector.multi_reduction <add>, %26, %cst_13 [1] : vector<16x128xf32> to vector<16xf32>
    %28 = vector.shape_cast %27 : vector<16xf32> to vector<16x1xf32>
    %29 = vector.broadcast %28 : vector<16x1xf32> to vector<16x128xf32>
    %30 = arith.divf %26, %29 : vector<16x128xf32>
    %31 = arith.select %19, %30, %13 : vector<16x128xi1>, vector<16x128xf32>
    %c0_14 = arith.constant 0 : index
    %c0_15 = arith.constant 0 : index
    %32 = vector.load %arg6[%c0_14, %c0_15] : memref<16x128xf32, #tpu.memory_space<vmem>>, vector<16x128xf32>
    tpu.vector_store %arg6[%c0_14, %c0_15], %31 {strides = array<i32>} : memref<16x128xf32, #tpu.memory_space<vmem>>, vector<16x128xf32>,
    return
  }
  func.func @transform_0(%arg0: i32) -> (i32, i32) {
    %c0_i32 = arith.constant 0 : i32
    %c0_i32_0 = arith.constant 0 : i32
    return %arg0, %c0_i32 : i32, i32
  }
  func.func @transform_1(%arg0: i32) -> (i32, i32) {
    %c0_i32 = arith.constant 0 : i32
    %c0_i32_0 = arith.constant 0 : i32
    %c0_i32_1 = arith.constant 0 : i32
    return %c0_i32, %c0_i32_0 : i32, i32
  }
  func.func @transform_2(%arg0: i32) -> (i32, i32) {
    %c0_i32 = arith.constant 0 : i32
    %c0_i32_0 = arith.constant 0 : i32
    %c0_i32_1 = arith.constant 0 : i32
    return %c0_i32, %c0_i32_0 : i32, i32
  }
  func.func @transform_3(%arg0: i32) -> (i32, i32) {
    %c0_i32 = arith.constant 0 : i32
    %c0_i32_0 = arith.constant 0 : i32
    %c0_i32_1 = arith.constant 0 : i32
    return %c0_i32, %c0_i32_0 : i32, i32
  }
  func.func @transform_4(%arg0: i32) -> (i32, i32) {
    %c0_i32 = arith.constant 0 : i32
    %c0_i32_0 = arith.constant 0 : i32
    %c0_i32_1 = arith.constant 0 : i32
    return %c0_i32, %c0_i32_0 : i32, i32
  }
  func.func @transform_5(%arg0: i32) -> (i32, i32) {
    %c0_i32 = arith.constant 0 : i32
    %c0_i32_0 = arith.constant 0 : i32
    return %arg0, %c0_i32 : i32, i32
  }
}

</mosaic_0001>

<llo_original>
// kernel: tpu_custom_call.1
$region0: #{tpu_custom_call.1}
  #allocation0 [shape = 'u32[]', space=smem, size = 0x4, offset = 0x4, fixed_abs, tag = 'smem constant byte address 0x4 - core index']
  #allocation1 [shape = 'u32[72,128]{1,0:T(1,128)}', space=vmem, size = 0x9000, scoped, tag = 'internal scratch']
  %s0 = inlined_call_operand.hbm [shape: bf16[32,32], index: 0, kind: input, shape index: {}]
  %s1 = inlined_call_operand.hbm [shape: bf16[32,64], index: 1, kind: input, shape index: {}]
  %s2 = inlined_call_operand.vmem [shape: f32[1,64], index: 2, kind: input, shape index: {}]
  %s3 = inlined_call_operand.hbm [shape: bf16[64,128], index: 3, kind: input, shape index: {}]
  %s4 = inlined_call_operand.vmem [shape: f32[1,128], index: 4, kind: input, shape index: {}]
  %s5 = inlined_call_operand.hbm [shape: f32[32,128], index: 5, kind: output, shape index: {}]
  %s6 = sld [smem:[#allocation0]]
  $region65: #{tpu_custom_call.1} parent=0
    _
  %s8 = ssub.s32 1, %s6
  %s9 = scalar_select 0, %s8, %s6
  $region1: #{tpu_custom_call.1} parent=0
    #allocation2 [shape = 'u8[8192]{0}', space=vmem, size = 0x2000, scoped, tag = 'input window, operand 0']
    #allocation3 [shape = 's32[2]{0}', space=sflag, size = 0x8, scoped, tag = 'scoped memory for tpu_custom_call.1']
    #allocation4 [shape = 's32[2]{0}', space=sflag, size = 0x8, scoped, tag = 'scoped memory for tpu_custom_call.1']
    #allocation5 [shape = 'u8[8192]{0}', space=vmem, size = 0x2000, scoped, tag = 'input window, operand 1, single buffered']
    #allocation6 [shape = 's32[1]{0}', space=sflag, size = 0x4, scoped, tag = 'scoped memory for tpu_custom_call.1']
    #allocation7 [shape = 'u8[16384]{0}', space=vmem, size = 0x4000, scoped, tag = 'input window, operand 3, single buffered']
    #allocation8 [shape = 'u8[16384]{0}', space=vmem, size = 0x4000, scoped, tag = 'output window, operand 0']
    %10 = vsyncpa [#allocation3], 0
    %s11 = scalar_lea.sflag [#allocation3], 1
    %12 = vsyncpa %s11, 0
    %13 = vsyncpa [#allocation6], 0
    %14 = vsyncpa [#allocation4], 0
    %s15 = scalar_lea.sflag [#allocation4], 1
    %16 = vsyncpa %s15, 0
    loop: start=0, step=1, limit=4
    $region2: #{tpu_custom_call.1} parent=1 // loop_pre_header
      _
    $region3: #{tpu_custom_call.1} parent=1 // loop_header
      %s18 = sphi 0, %s22
      %p19 = scmp.ge.s32.totalorder %s18, 4
      %s28 = sphi 0, %s30
      %s31 = sphi 0, %s28
      %s32 = sphi 0, %s31
      %s48 = sphi 0, %s32
      %s52 = sphi 0, %s52
      %s54 = sphi 0, %s52
      %s55 = sphi 0, %s54
      %s69 = sphi 0, %s55
      %s73 = sphi 0, %s73
      %s75 = sphi 0, %s73
      %s76 = sphi 0, %s75
      %s90 = sphi 0, %s76
      %s94 = sphi 0, %s94
      %s96 = sphi 0, %s94
      %s97 = sphi 0, %s96
      %s111 = sphi 0, %s97
      %s115 = sphi 0, %s115
      %s117 = sphi 0, %s115
      %s118 = sphi 0, %s117
      %s132 = sphi 0, %s118
      %s138 = sphi 0, %s140
      %s141 = sphi 0, %s138
      %s142 = sphi 0, %s141
      %s158 = sphi 0, %s142
    $region4: #{tpu_custom_call.1} parent=1 // loop_header_branch
      %21 = sbr.rel (%p19) target = $region8
    $region5: #{tpu_custom_call.1} parent=1 // loop_body
      %s23 = ssub.s32 %s18, 1
      %s24 = ssub.s32 %s18, 2
      %s25 = sadd.s32 %s18, 1
      %s26 = ssub.s32 %s18, %s25
      %p27 = scmp.eq.s32.totalorder %s26, 0
      %s29 = sadd.s32 %s28, 1
      %s30 = scalar_select %p27, %s28, %s29
      %p33 = pneg %p27
      %p34 = scmp.eq.s32.totalorder %s18, 1
      %p35 = por %p33, %p34
      %p36 = scmp.ne.s32.totalorder %s28, %s31
      %p37 = scmp.eq.s32.totalorder %s18, 0
      %p38 = por %p36, %p37
      %p39 = scmp.ne.s32.totalorder %s28, %s31
      %p40 = scmp.eq.s32.totalorder %s23, 1
      %p41 = por %p39, %p40
      %p42 = scmp.ne.s32.totalorder %s31, %s32
      %p43 = scmp.eq.s32.totalorder %s23, 0
      %p44 = por %p42, %p43
      %p45 = scmp.ne.s32.totalorder %s31, %s32
      %p46 = scmp.eq.s32.totalorder %s24, 1
      %p47 = por %p45, %p46
      %p49 = scmp.ne.s32.totalorder %s32, %s48
      %p50 = scmp.eq.s32.totalorder %s24, 0
      %p51 = por %p49, %p50
      %s53 = sadd.s32 %s52, 1
      %p56 = scmp.eq.s32.totalorder %s18, 1
      %p57 = scmp.ne.s32.totalorder %s52, %s54
      %p58 = scmp.eq.s32.totalorder %s18, 0
      %p59 = por %p57, %p58
      %p60 = scmp.ne.s32.totalorder %s52, %s54
      %p61 = scmp.eq.s32.totalorder %s23, 1
      %p62 = por %p60, %p61
      %p63 = scmp.ne.s32.totalorder %s54, %s55
      %p64 = scmp.eq.s32.totalorder %s23, 0
      %p65 = por %p63, %p64
      %p66 = scmp.ne.s32.totalorder %s54, %s55
      %p67 = scmp.eq.s32.totalorder %s24, 1
      %p68 = por %p66, %p67
      %p70 = scmp.ne.s32.totalorder %s55, %s69
      %p71 = scmp.eq.s32.totalorder %s24, 0
      %p72 = por %p70, %p71
      %s74 = sadd.s32 %s73, 1
      %p77 = scmp.eq.s32.totalorder %s18, 1
      %p78 = scmp.ne.s32.totalorder %s73, %s75
      %p79 = scmp.eq.s32.totalorder %s18, 0
      %p80 = por %p78, %p79
      %p81 = scmp.ne.s32.totalorder %s73, %s75
      %p82 = scmp.eq.s32.totalorder %s23, 1
      %p83 = por %p81, %p82
      %p84 = scmp.ne.s32.totalorder %s75, %s76
      %p85 = scmp.eq.s32.totalorder %s23, 0
      %p86 = por %p84, %p85
      %p87 = scmp.ne.s32.totalorder %s75, %s76
      %p88 = scmp.eq.s32.totalorder %s24, 1
      %p89 = por %p87, %p88
      %p91 = scmp.ne.s32.totalorder %s76, %s90
      %p92 = scmp.eq.s32.totalorder %s24, 0
      %p93 = por %p91, %p92
      %s95 = sadd.s32 %s94, 1
      %p98 = scmp.eq.s32.totalorder %s18, 1
      %p99 = scmp.ne.s32.totalorder %s94, %s96
      %p100 = scmp.eq.s32.totalorder %s18, 0
      %p101 = por %p99, %p100
      %p102 = scmp.ne.s32.totalorder %s94, %s96
      %p103 = scmp.eq.s32.totalorder %s23, 1
      %p104 = por %p102, %p103
      %p105 = scmp.ne.s32.totalorder %s96, %s97
      %p106 = scmp.eq.s32.totalorder %s23, 0
      %p107 = por %p105, %p106
      %p108 = scmp.ne.s32.totalorder %s96, %s97
      %p109 = scmp.eq.s32.totalorder %s24, 1
      %p110 = por %p108, %p109
      %p112 = scmp.ne.s32.totalorder %s97, %s111
      %p113 = scmp.eq.s32.totalorder %s24, 0
      %p114 = por %p112, %p113
      %s116 = sadd.s32 %s115, 1
      %p119 = scmp.eq.s32.totalorder %s18, 1
      %p120 = scmp.ne.s32.totalorder %s115, %s117
      %p121 = scmp.eq.s32.totalorder %s18, 0
      %p122 = por %p120, %p121
      %p123 = scmp.ne.s32.totalorder %s115, %s117
      %p124 = scmp.eq.s32.totalorder %s23, 1
      %p125 = por %p123, %p124
      %p126 = scmp.ne.s32.totalorder %s117, %s118
      %p127 = scmp.eq.s32.totalorder %s23, 0
      %p128 = por %p126, %p127
      %p129 = scmp.ne.s32.totalorder %s117, %s118
      %p130 = scmp.eq.s32.totalorder %s24, 1
      %p131 = por %p129, %p130
      %p133 = scmp.ne.s32.totalorder %s118, %s132
      %p134 = scmp.eq.s32.totalorder %s24, 0
      %p135 = por %p133, %p134
      %s136 = ssub.s32 %s18, %s25
      %p137 = scmp.eq.s32.totalorder %s136, 0
      %s139 = sadd.s32 %s138, 1
      %s140 = scalar_select %p137, %s138, %s139
      %p143 = pneg %p137
      %p144 = scmp.eq.s32.totalorder %s18, 1
      %p145 = por %p143, %p144
      %p146 = scmp.ne.s32.totalorder %s138, %s141
      %p147 = scmp.eq.s32.totalorder %s18, 0
      %p148 = por %p146, %p147
      %p149 = scmp.ne.s32.totalorder %s138, %s141
      %p150 = scmp.eq.s32.totalorder %s23, 1
      %p151 = por %p149, %p150
      %p152 = scmp.ne.s32.totalorder %s141, %s142
      %p153 = scmp.eq.s32.totalorder %s23, 0
      %p154 = por %p152, %p153
      %p155 = scmp.ne.s32.totalorder %s141, %s142
      %p156 = scmp.eq.s32.totalorder %s24, 1
      %p157 = por %p155, %p156
      %p159 = scmp.ne.s32.totalorder %s142, %s158
      %p160 = scmp.eq.s32.totalorder %s24, 0
      %p161 = por %p159, %p160
      %p162 = scmp.le.s32.totalorder 1, %s18
      %p163 = scmp.lt.s32.totalorder %s18, 3
      %p164 = pnand %p162, %p163
      %p165 = pneg %p164
      // Predicated region
      $region9: #{tpu_custom_call.1} parent=5 // pred_check
        _
      $region10: #{tpu_custom_call.1} parent=5 // pred_check_branch
        %167 = sbr.rel (%p164) target = $region12
      $region11: #{tpu_custom_call.1} parent=5 // pred_region
        %s168 = ssub.s32 %s18, 1
        // Predicated region
        $region13: #{tpu_custom_call.1} parent=11 // pred_check
          %p169 = pneg %p65
        $region14: #{tpu_custom_call.1} parent=11 // pred_check_branch
          %171 = sbr.rel (%p169) target = $region16
        $region15: #{tpu_custom_call.1} parent=11 // pred_region
          %173 = vsyncadd [#allocation6], 0
          %s174 = sshll.u32 %s1, 4
          %s175 = int_to_ptr.hbm [resolvable:$true] %s174
          %s176 = sshll.u32 [#allocation5], 4
          %s177 = int_to_ptr.vmem [resolvable:$true] %s176
          %182 = dma.hbm_to_vmem [thread:$0]  %s175, 256, %s177, [#allocation6], 64, 64, 4
        $region16: #{tpu_custom_call.1} parent=11 // pred_fallthru
          _
        // Predicated region
        $region17: #{tpu_custom_call.1} parent=11 // pred_check
          %p183 = pneg %p86
        $region18: #{tpu_custom_call.1} parent=11 // pred_check_branch
          %185 = sbr.rel (%p183) target = $region20
        $region19: #{tpu_custom_call.1} parent=11 // pred_region
          _
        $region20: #{tpu_custom_call.1} parent=11 // pred_fallthru
          _
        // Predicated region
        $region21: #{tpu_custom_call.1} parent=11 // pred_check
          %p186 = pneg %p107
        $region22: #{tpu_custom_call.1} parent=11 // pred_check_branch
          %188 = sbr.rel (%p186) target = $region24
        $region23: #{tpu_custom_call.1} parent=11 // pred_region
          %190 = vsyncadd [#allocation6], 0
          %s191 = sshll.u32 %s3, 4
          %s192 = int_to_ptr.hbm [resolvable:$true] %s191
          %s193 = sshll.u32 [#allocation7], 4
          %s194 = int_to_ptr.vmem [resolvable:$true] %s193
          %199 = dma.hbm_to_vmem [thread:$0]  %s192, 512, %s194, [#allocation6], 64, 64, 4
        $region24: #{tpu_custom_call.1} parent=11 // pred_fallthru
          _
        // Predicated region
        $region25: #{tpu_custom_call.1} parent=11 // pred_check
          %p200 = pneg %p128
        $region26: #{tpu_custom_call.1} parent=11 // pred_check_branch
          %202 = sbr.rel (%p200) target = $region28
        $region27: #{tpu_custom_call.1} parent=11 // pred_region
          _
        $region28: #{tpu_custom_call.1} parent=11 // pred_fallthru
          _
      $region12: #{tpu_custom_call.1} parent=5 // pred_fallthru
        _
      %p203 = scmp.lt.s32.totalorder %s18, 2
      // Predicated region
      $region29: #{tpu_custom_call.1} parent=5 // pred_check
        %p204 = pneg %p203
      $region30: #{tpu_custom_call.1} parent=5 // pred_check_branch
        %206 = sbr.rel (%p204) target = $region32
      $region31: #{tpu_custom_call.1} parent=5 // pred_region
        // Predicated region
        $region33: #{tpu_custom_call.1} parent=31 // pred_check
          %p207 = pneg %p38
        $region34: #{tpu_custom_call.1} parent=31 // pred_check_branch
          %209 = sbr.rel (%p207) target = $region36
        $region35: #{tpu_custom_call.1} parent=31 // pred_region
          %s210 = sand.u32 %s28, 1
          %s211 = scalar_lea.sflag [#allocation3], %s210
          %s212 = sand.u32 %s28, 1
          %s213 = smul.addr %s212, 8
          %s214 = scalar_lea.vmem [#allocation2], %s213
          %s215 = smul.u32 2, %s18
          %217 = vsyncadd %s211, 0
          %s218 = smul.addr %s215, 4
          %s219 = scalar_lea.hbm %s0, %s218
          %s220 = sshll.u32 %s219, 4
          %s221 = int_to_ptr.hbm [resolvable:$true] %s220
          %s222 = sshll.u32 %s214, 4
          %s223 = int_to_ptr.vmem [resolvable:$true] %s222
          %228 = dma.hbm_to_vmem [thread:$0]  %s221, 128, %s223, %s211, 64, 64, 4
        $region36: #{tpu_custom_call.1} parent=31 // pred_fallthru
          _
      $region32: #{tpu_custom_call.1} parent=5 // pred_fallthru
        _
      %p229 = scmp.le.s32.totalorder 1, %s18
      %p230 = scmp.lt.s32.totalorder %s18, 3
      %p231 = pnand %p229, %p230
      %p232 = pneg %p231
      // Predicated region
      $region37: #{tpu_custom_call.1} parent=5 // pred_check
        _
      $region38: #{tpu_custom_call.1} parent=5 // pred_check_branch
        %234 = sbr.rel (%p231) target = $region40
      $region39: #{tpu_custom_call.1} parent=5 // pred_region
        %s235 = ssub.s32 %s18, 1
        %s236 = sand.u32 %s31, 1
        %s237 = scalar_lea.sflag [#allocation3], %s236
        %s238 = sand.u32 %s31, 1
        %s239 = smul.addr %s238, 8
        %s240 = scalar_lea.vmem [#allocation2], %s239
        // Predicated region
        $region41: #{tpu_custom_call.1} parent=39 // pred_check
          %p241 = pneg %p44
        $region42: #{tpu_custom_call.1} parent=39 // pred_check_branch
          %243 = sbr.rel (%p241) target = $region44
        $region43: #{tpu_custom_call.1} parent=39 // pred_region
          %245 = dma.done %s237, 128
        $region44: #{tpu_custom_call.1} parent=39 // pred_fallthru
          _
        // Predicated region
        $region45: #{tpu_custom_call.1} parent=39 // pred_check
          %p246 = pneg %p65
        $region46: #{tpu_custom_call.1} parent=39 // pred_check_branch
          %248 = sbr.rel (%p246) target = $region48
        $region47: #{tpu_custom_call.1} parent=39 // pred_region
          %250 = dma.done [#allocation6], 256
        $region48: #{tpu_custom_call.1} parent=39 // pred_fallthru
          _
        // Predicated region
        $region49: #{tpu_custom_call.1} parent=39 // pred_check
          %p251 = pneg %p107
        $region50: #{tpu_custom_call.1} parent=39 // pred_check_branch
          %253 = sbr.rel (%p251) target = $region52
        $region51: #{tpu_custom_call.1} parent=39 // pred_region
          %255 = dma.done [#allocation6], 512
        $region52: #{tpu_custom_call.1} parent=39 // pred_fallthru
          _
        %s256 = sand.u32 %s31, 1
        %s257 = scalar_lea.sflag [#allocation3], %s256
        %s258 = sand.u32 %s31, 1
        %s259 = smul.addr %s258, 8
        %s260 = scalar_lea.vmem [#allocation2], %s259
        %p261 = pneg %p44
        %p262 = pneg %p41
        %p263 = pneg %p65
        %p264 = pneg %p62
        %p265 = pneg %p86
        %p266 = pneg %p83
        %p267 = pneg %p107
        %p268 = pneg %p104
        %p269 = pneg %p128
        %p270 = pneg %p125
        %p271 = pneg %p154
        %p272 = pneg %p151
        %s273 = sand.u32 %s141, 1
        %s274 = scalar_lea.sflag [#allocation4], %s273
        %s275 = sand.u32 %s141, 1
        %s276 = smul.addr %s275, 16
        %s277 = scalar_lea.vmem [#allocation8], %s276
        %s278 = smul.u32 2, %s23
        %s279 = smul.u32 2, %s23
        %v281 = vld [vmem:[%s240] sm:$0xf]
        %v282 = vld [vmem:[%s240 + $0x4] sm:$0xf]
        %v283 = vld [vmem:[#allocation5] sm:$0xf]
        %v284 = vld [vmem:[#allocation5 + $0x4] sm:$0xf]
        %v285 = vld [vmem:[#allocation5 + $0x8] sm:$0xf]
        %v286 = vld [vmem:[#allocation5 + $0xc] sm:$0xf]
        %v287 = vld [vmem:[%s2] sm:$0x1]
        %v289 = vperm.slane %v287, 0
        %v293 = vunpack.c.l.b16 %v281
        %v294 = vunpack.c.l.b16 %v282
        %v295 = vpack.c.b16 %v294, %v293
        %v300 = vunpack.c.l.b16 %v283
        %v301 = vunpack.c.l.b16 %v284
        %v302 = vunpack.c.l.b16 %v285
        %v303 = vunpack.c.l.b16 %v286
        %v304 = vpack.c.b16 %v301, %v300
        %v305 = vpack.c.b16 %v303, %v302
        %vm308 = vcmask 261120
        %v310 = vsel %vm308, %v295, 0
        %312 = vmatpush.bf16.msra.mxu0 0
        %313 = vmatpush.bf16.msra.mxu0 0
        %314 = vmatpush.bf16.msra.mxu0 0
        %315 = vmatpush.bf16.msra.mxu0 0
        %316 = vmatpush.bf16.msra.mxu0 0
        %317 = vmatpush.bf16.msra.mxu0 0
        %318 = vmatpush.bf16.msra.mxu0 %v305
        %319 = vmatpush.bf16.msra.mxu0 %v304
        %320 = vmatmul.bf16.gmra.mxu0 %v310
        %v321 = vpop.f32.mrf.mxu0
        %v322 = vadd.f32 %v289, %v321
        %v323 = vpop.f32.mrf.mxu0
        %v324 = vadd.f32 %v289, %v323
        %325 = vdwg.mxu0
        %v326 = vmax.f32 %v322, 0.0
        %v327 = vmax.f32 %v324, 0.0
        %v328 = vpack.c.bf16 %v327, %v326
        %v329 = vld [vmem:[#allocation7] sm:$0xf]
        %v330 = vld [vmem:[#allocation7 + $0x4] sm:$0xf]
        %v331 = vld [vmem:[#allocation7 + $0x8] sm:$0xf]
        %v332 = vld [vmem:[#allocation7 + $0xc] sm:$0xf]
        %v333 = vld [vmem:[#allocation7 + $0x10] sm:$0xf]
        %v334 = vld [vmem:[#allocation7 + $0x14] sm:$0xf]
        %v335 = vld [vmem:[#allocation7 + $0x18] sm:$0xf]
        %v336 = vld [vmem:[#allocation7 + $0x1c] sm:$0xf]
        %v337 = vld [vmem:[%s4] sm:$0x1]
        %v339 = vperm.slane %v337, 0
        %v349 = vunpack.c.l.b16 %v329
        %v350 = vunpack.c.l.b16 %v330
        %v351 = vunpack.c.l.b16 %v331
        %v352 = vunpack.c.l.b16 %v332
        %v353 = vunpack.c.l.b16 %v333
        %v354 = vunpack.c.l.b16 %v334
        %v355 = vunpack.c.l.b16 %v335
        %v356 = vunpack.c.l.b16 %v336
        %v357 = vpack.c.b16 %v350, %v349
        %v358 = vpack.c.b16 %v352, %v351
        %v359 = vpack.c.b16 %v354, %v353
        %v360 = vpack.c.b16 %v356, %v355
        %vm365 = vcmask 523264
        %v367 = vsel %vm365, %v328, 0
        %369 = vmatpush.bf16.msra.mxu0 0
        %370 = vmatpush.bf16.msra.mxu0 0
        %371 = vmatpush.bf16.msra.mxu0 0
        %372 = vmatpush.bf16.msra.mxu0 0
        %373 = vmatpush.bf16.msra.mxu0 %v360
        %374 = vmatpush.bf16.msra.mxu0 %v359
        %375 = vmatpush.bf16.msra.mxu0 %v358
        %376 = vmatpush.bf16.msra.mxu0 %v357
        %377 = vmatmul.bf16.gmra.mxu0 %v367
        %v378 = vpop.f32.mrf.mxu0
        %v379 = vadd.f32 %v339, %v378
        %v380 = vpop.f32.mrf.mxu0
        %v381 = vadd.f32 %v339, %v380
        %382 = vdwg.mxu0
        %v383 = vlaneseq
        %v384 = vand.u32 %v383, 127
        %vm385 = vcmp.ge.s32.totalorder %v384, 1
        %vm386 = vcmp.lt.s32.totalorder %v384, 9
        %vm387 = vmand %vm385, %vm386
        %v388 = vsel %vm387, %v379, -inf
        %v389 = vsel %vm387, %v381, -inf
        %390 = vmax.xlane.f32.xlu0 %v388
        %v391 = vpop.xlane.xlu0 %390
        %392 = vmax.xlane.f32.xlu0 %v389
        %v393 = vpop.xlane.xlu0 %392
        %v394 = vsub.f32 %v388, %v391
        %v395 = vsub.f32 %v389, %v393
        %v396 = vmul.f32 %v394, 1.442695
        %v397 = vpow.pop %v396
        %v398 = vmul.f32 %v395, 1.442695
        %v399 = vpow.pop %v398
        %400 = vadd.xlane.f32.xlu0 %v397
        %v401 = vpop.xlane.xlu0 %400
        %402 = vadd.xlane.f32.xlu0 %v399
        %v403 = vpop.xlane.xlu0 %402
        %v404 = vrcp.pop %v401
        %v405 = vmul.f32 %v401, %v404
        %v406 = vsub.f32 1.0, %v405
        %v407 = vmul.f32 %v404, %v406
        %v408 = vadd.f32 %v404, %v407
        %vm409 = vweird.f32 %v401
        %vm410 = vweird.f32 %v404
        %vm411 = vmor %vm409, %vm410
        %v412 = vsel %vm411, %v404, %v408
        %v413 = vand.u32 2147483647, %v401
        %vm414 = vcmp.eq.f32.partialorder %v413, 8.507059e+37
        %v415 = vand.u32 %v401, 2147483648
        %v416 = vor.u32 1.1754944e-38, %v415
        %v417 = vsel %vm414, %v416, %v412
        %v418 = vmul.f32 %v397, %v417
        %v419 = vrcp.pop %v403
        %v420 = vmul.f32 %v403, %v419
        %v421 = vsub.f32 1.0, %v420
        %v422 = vmul.f32 %v419, %v421
        %v423 = vadd.f32 %v419, %v422
        %vm424 = vweird.f32 %v403
        %vm425 = vweird.f32 %v419
        %vm426 = vmor %vm424, %vm425
        %v427 = vsel %vm426, %v419, %v423
        %v428 = vand.u32 2147483647, %v403
        %vm429 = vcmp.eq.f32.partialorder %v428, 8.507059e+37
        %v430 = vand.u32 %v403, 2147483648
        %v431 = vor.u32 1.1754944e-38, %v430
        %v432 = vsel %vm429, %v431, %v427
        %v433 = vmul.f32 %v399, %v432
        %v434 = vsel %vm387, %v418, %v379
        %v435 = vsel %vm387, %v433, %v381
        %436 = vst [vmem:[%s277] sm:$0xff] %v434
        %437 = vst [vmem:[%s277 + $0x8] sm:$0xff] %v435
        %s438 = sand.u32 %s141, 1
        %s439 = scalar_lea.sflag [#allocation4], %s438
        %s440 = sand.u32 %s141, 1
        %s441 = smul.addr %s440, 16
        %s442 = scalar_lea.vmem [#allocation8], %s441
        // Predicated region
        $region53: #{tpu_custom_call.1} parent=39 // pred_check
          %p443 = pneg %p151
        $region54: #{tpu_custom_call.1} parent=39 // pred_check_branch
          %445 = sbr.rel (%p443) target = $region56
        $region55: #{tpu_custom_call.1} parent=39 // pred_region
          %s446 = smul.u32 2, %s23
          %448 = vsyncadd %s439, 0
          %s449 = smul.addr %s446, 8
          %s450 = scalar_lea.hbm %s5, %s449
          %s451 = sshll.u32 %s442, 4
          %s452 = int_to_ptr.vmem [resolvable:$true] %s451
          %s453 = sshll.u32 %s450, 4
          %s454 = int_to_ptr.hbm [resolvable:$true] %s453
          %459 = dma.vmem_to_hbm [thread:$0]  %s452, 256, %s454, %s439, 128, 128, 8
        $region56: #{tpu_custom_call.1} parent=39 // pred_fallthru
          _
      $region40: #{tpu_custom_call.1} parent=5 // pred_fallthru
        _
      %p460 = scmp.le.s32.totalorder 2, %s18
      // Predicated region
      $region57: #{tpu_custom_call.1} parent=5 // pred_check
        %p461 = pneg %p460
      $region58: #{tpu_custom_call.1} parent=5 // pred_check_branch
        %463 = sbr.rel (%p461) target = $region60
      $region59: #{tpu_custom_call.1} parent=5 // pred_region
        %s464 = ssub.s32 %s18, 2
        // Predicated region
        $region61: #{tpu_custom_call.1} parent=59 // pred_check
          %p465 = pneg %p157
        $region62: #{tpu_custom_call.1} parent=59 // pred_check_branch
          %467 = sbr.rel (%p465) target = $region64
        $region63: #{tpu_custom_call.1} parent=59 // pred_region
          %s468 = sand.u32 %s142, 1
          %s469 = scalar_lea.sflag [#allocation4], %s468
          %s470 = sand.u32 %s142, 1
          %s471 = smul.addr %s470, 16
          %s472 = scalar_lea.vmem [#allocation8], %s471
          %474 = dma.done %s469, 256
        $region64: #{tpu_custom_call.1} parent=59 // pred_fallthru
          _
      $region60: #{tpu_custom_call.1} parent=5 // pred_fallthru
        _
    $region6: #{tpu_custom_call.1} parent=1 // loop_footer
      %s22 = sadd.s32 1, %s18
    $region7: #{tpu_custom_call.1} parent=1 // loop_footer_branch
      %17 = sbr.rel target = $region3
    $region8: #{tpu_custom_call.1} parent=1 // loop_exit
      _
    %475 = vsyncpa [#allocation3], 1
    %s476 = scalar_lea.sflag [#allocation3], 1
    %477 = vsyncpa %s476, 1
    %478 = vsyncpa [#allocation6], 1
    %479 = vsyncpa [#allocation4], 1
    %s480 = scalar_lea.sflag [#allocation4], 1
    %481 = vsyncpa %s480, 1

</llo_original>
